<compile_context>
chip_gen: v5e
topology: v5e:2x2
jax: 0.10.0
libtpu: 0.0.40
codegen_flags: <defaults>
</compile_context>

<pallas_src>
import jax
import jax.numpy as jnp
from jax.experimental import pallas as pl
from jax.experimental.pallas import tpu as pltpu  # noqa: F401  (TPU backend)

NUM_REPEATS = 20  # 6 (t1) + 14 (t2) copies of the same matmul result


def _mm_tiled_rhs_kernel(x1_ref, x2t_ref, out_ref):
    # Single MXU matmul: (M, K) @ (K, NUM_REPEATS*N) -> (M, NUM_REPEATS*N).
    # Column replication was folded into the RHS, so the result is already
    # lane-dense; one store, no concat / cross-lane shuffles.
    out_ref[...] = jnp.dot(
        x1_ref[...], x2t_ref[...], preferred_element_type=jnp.float32
    ).astype(out_ref.dtype)


def model_forward(x1: jax.Array, x2: jax.Array) -> jax.Array:
    M, K = x1.shape
    K2, N = x2.shape
    assert K == K2

    # Fold the 20x column replication into the matmul operand (layout plumbing
    # done once in the wrapper; keeps the kernel to a single dot + store).
    x2_tiled = jnp.tile(x2, (1, NUM_REPEATS))  # (K, NUM_REPEATS * N)

    out_shape = jax.ShapeDtypeStruct((M, NUM_REPEATS * N), x1.dtype)

    return pl.pallas_call(
        _mm_tiled_rhs_kernel,
        out_shape=out_shape,
        # Whole problem fits in a single VMEM block (block shape == full array
        # dims, so the (8,128) tiling constraint does not apply).
        in_specs=[
            pl.BlockSpec((M, K), lambda: (0, 0)),
            pl.BlockSpec((K, NUM_REPEATS * N), lambda: (0, 0)),
        ],
        out_specs=pl.BlockSpec((M, NUM_REPEATS * N), lambda: (0, 0)),
    )(x1, x2_tiled)


if __name__ == "__main__":
    key = jax.random.PRNGKey(0)
    k1, k2 = jax.random.split(key)
    # Same shapes as the PyTorch script: two 5x5 float32 matrices.
    x1 = jax.random.normal(k1, (5, 5), dtype=jnp.float32)
    x2 = jax.random.normal(k2, (5, 5), dtype=jnp.float32)

    out = model_forward(x1, x2)
    out = jax.block_until_ready(out)

    # Reference check in plain JAX (mirrors the PyTorch module exactly).
    c_ref = x1 @ x2
    ref = jnp.concatenate([c_ref] * NUM_REPEATS, axis=1)
    assert out.shape == (5, 100), out.shape
    assert jnp.allclose(out, ref, atol=1e-5, rtol=1e-5), "mismatch vs reference"

    print("KERNEL_OK")
</pallas_src>

<mosaic_0001>
module attributes {stable_mosaic.version = 11 : i64} {
  func.func @_mm_tiled_rhs_kernel(%arg0: memref<5x5xf32, #tpu.memory_space<vmem>>, %arg1: memref<5x100xf32, #tpu.memory_space<vmem>>, %arg2: memref<5x100xf32, #tpu.memory_space<vmem>>) attributes {dimension_semantics = [], scalar_prefetch = 0 : i64, scratch_operands = 0 : i64, tpu.core_type = #tpu.core_type<tc>} {
    %c0 = arith.constant 0 : index
    %c0_0 = arith.constant 0 : index
    %0 = vector.load %arg0[%c0, %c0_0] : memref<5x5xf32, #tpu.memory_space<vmem>>, vector<5x5xf32>
    %c0_1 = arith.constant 0 : index
    %c0_2 = arith.constant 0 : index
    %1 = vector.load %arg1[%c0_1, %c0_2] : memref<5x100xf32, #tpu.memory_space<vmem>>, vector<5x100xf32>
    %cst = arith.constant dense<0.000000e+00> : vector<5x100xf32>
    %2 = tpu.matmul %0, %1, %cst {dimension_numbers = #tpu.dot_dimension_numbers<[1], [0], [0], [1], [0, 0, 1, 1], [], []>} : vector<5x5xf32>, vector<5x100xf32>, vector<5x100xf32> -> vector<5x100xf32>
    %c0_3 = arith.constant 0 : index
    %c0_4 = arith.constant 0 : index
    %3 = vector.load %arg2[%c0_3, %c0_4] : memref<5x100xf32, #tpu.memory_space<vmem>>, vector<5x100xf32>
    tpu.vector_store %arg2[%c0_3, %c0_4], %2 {strides = array<i32>} : memref<5x100xf32, #tpu.memory_space<vmem>>, vector<5x100xf32>,
    return
  }
}

</mosaic_0001>

<llo_original>
// kernel: tpu_custom_call.1
$region0: #{tpu_custom_call.1}
  #allocation0 [shape = 'u32[]', space=smem, size = 0x4, offset = 0x4, fixed_abs, tag = 'smem constant byte address 0x4 - core index']
  #allocation1 [shape = 'u32[72,128]{1,0:T(1,128)}', space=vmem, size = 0x9000, scoped, tag = 'internal scratch']
  %s0 = inlined_call_operand.hbm [shape: f32[5,5], index: 0, kind: input, shape index: {}]
  %s1 = inlined_call_operand.hbm [shape: f32[5,100], index: 1, kind: input, shape index: {}]
  %s2 = inlined_call_operand.hbm [shape: f32[5,100], index: 2, kind: output, shape index: {}]
  %s3 = sld [smem:[#allocation0]]
  $region26: #{tpu_custom_call.1} parent=0
    _
  %s5 = ssub.s32 1, %s3
  %s6 = scalar_select 0, %s5, %s3
  $region1: #{tpu_custom_call.1} parent=0
    #allocation2 [shape = 'u8[4096]{0}', space=vmem, size = 0x1000, scoped, tag = 'input window, operand 0, single buffered']
    #allocation3 [shape = 's32[1]{0}', space=sflag, size = 0x4, scoped, tag = 'scoped memory for tpu_custom_call.1']
    #allocation4 [shape = 's32[1]{0}', space=sflag, size = 0x4, scoped, tag = 'scoped memory for tpu_custom_call.1']
    #allocation5 [shape = 'u8[4096]{0}', space=vmem, size = 0x1000, scoped, tag = 'input window, operand 1, single buffered']
    #allocation6 [shape = 's32[1]{0}', space=sflag, size = 0x4, scoped, tag = 'scoped memory for tpu_custom_call.1']
    #allocation7 [shape = 'u8[4096]{0}', space=vmem, size = 0x1000, scoped, tag = 'output window, operand 0, single buffered']
    %7 = vsyncpa [#allocation3], 0
    %8 = vsyncpa [#allocation6], 0
    %9 = vsyncpa [#allocation4], 0
    // Predicated region
    $region2: #{tpu_custom_call.1} parent=1 // pred_check
      _
    $region3: #{tpu_custom_call.1} parent=1 // pred_check_branch
      %11 = sbr.rel (0) target = $region5
    $region4: #{tpu_custom_call.1} parent=1 // pred_region
      %13 = vsyncadd [#allocation3], 0
      %s15 = sshll.u32 %s0, 4
      %s16 = int_to_ptr.hbm [resolvable:$true] %s15
      %s17 = sshll.u32 [#allocation2], 4
      %s18 = int_to_ptr.vmem [resolvable:$true] %s17
      %20 = dma.hbm_to_vmem [thread:$0]  %s16, 128, %s18, [#allocation3]
    $region5: #{tpu_custom_call.1} parent=1 // pred_fallthru
      _
    // Predicated region
    $region6: #{tpu_custom_call.1} parent=1 // pred_check
      _
    $region7: #{tpu_custom_call.1} parent=1 // pred_check_branch
      %22 = sbr.rel (0) target = $region9
    $region8: #{tpu_custom_call.1} parent=1 // pred_region
      %24 = vsyncadd [#allocation6], 0
      %s26 = sshll.u32 %s1, 4
      %s27 = int_to_ptr.hbm [resolvable:$true] %s26
      %s28 = sshll.u32 [#allocation5], 4
      %s29 = int_to_ptr.vmem [resolvable:$true] %s28
      %31 = dma.hbm_to_vmem [thread:$0]  %s27, 128, %s29, [#allocation6]
    $region9: #{tpu_custom_call.1} parent=1 // pred_fallthru
      _
    // Predicated region
    $region10: #{tpu_custom_call.1} parent=1 // pred_check
      _
    $region11: #{tpu_custom_call.1} parent=1 // pred_check_branch
      %33 = sbr.rel (0) target = $region13
    $region12: #{tpu_custom_call.1} parent=1 // pred_region
      %35 = dma.done [#allocation3], 128
    $region13: #{tpu_custom_call.1} parent=1 // pred_fallthru
      _
    // Predicated region
    $region14: #{tpu_custom_call.1} parent=1 // pred_check
      _
    $region15: #{tpu_custom_call.1} parent=1 // pred_check_branch
      %37 = sbr.rel (0) target = $region17
    $region16: #{tpu_custom_call.1} parent=1 // pred_region
      %39 = dma.done [#allocation6], 128
    $region17: #{tpu_custom_call.1} parent=1 // pred_fallthru
      _
    %v40 = vld [vmem:[#allocation2] sm:$0x1f]
    %v41 = vld [vmem:[#allocation5] sm:$0x1f]
    %vm42 = vcmask 39936
    %v44 = vsel %vm42, %v40, 0
    %vm46 = vcmask 1044480
    %v48 = vsel %vm46, %v41, 0
    %50 = vmatpush.msra.mxu0 0.0
    %51 = vmatpush.msra.mxu0 0.0
    %52 = vmatpush.msra.mxu0 0.0
    %53 = vmatpush.msra.mxu0 0.0
    %54 = vmatpush.msra.mxu0 0.0
    %55 = vmatpush.msra.mxu0 0.0
    %56 = vmatpush.msra.mxu0 0.0
    %57 = vmatpush.msra.mxu0 0.0
    %58 = vmatpush.msra.mxu0 0.0
    %59 = vmatpush.msra.mxu0 0.0
    %60 = vmatpush.msra.mxu0 0.0
    %61 = vmatpush.msra.mxu0 0.0
    %62 = vmatpush.msra.mxu0 0.0
    %63 = vmatpush.msra.mxu0 0.0
    %64 = vmatpush.msra.mxu0 0.0
    %65 = vmatpush.msra.mxu0 %v48
    %66 = vmatmul.f32.gmra.mxu0 %v44
    %v67 = vpop.f32.mrf.mxu0
    %v68 = vadd.f32 0.0, %v67
    %69 = vdwg.mxu0
    %vm70 = vcmask 815104
    %71 = vst.msk [vmem:[#allocation7] sm:$0x1f] %vm70, %v68
    // Predicated region
    $region18: #{tpu_custom_call.1} parent=1 // pred_check
      _
    $region19: #{tpu_custom_call.1} parent=1 // pred_check_branch
      %73 = sbr.rel (0) target = $region21
    $region20: #{tpu_custom_call.1} parent=1 // pred_region
      %75 = vsyncadd [#allocation4], 0
      %s77 = sshll.u32 [#allocation7], 4
      %s78 = int_to_ptr.vmem [resolvable:$true] %s77
      %s79 = sshll.u32 %s2, 4
      %s80 = int_to_ptr.hbm [resolvable:$true] %s79
      %82 = dma.vmem_to_hbm [thread:$0]  %s78, 128, %s80, [#allocation4]
    $region21: #{tpu_custom_call.1} parent=1 // pred_fallthru
      _
    // Predicated region
    $region22: #{tpu_custom_call.1} parent=1 // pred_check
      _
    $region23: #{tpu_custom_call.1} parent=1 // pred_check_branch
      %84 = sbr.rel (0) target = $region25
    $region24: #{tpu_custom_call.1} parent=1 // pred_region
      %86 = dma.done [#allocation4], 128
    $region25: #{tpu_custom_call.1} parent=1 // pred_fallthru
      _
    %87 = vsyncpa [#allocation3], 1
    %88 = vsyncpa [#allocation6], 1
    %89 = vsyncpa [#allocation4], 1

</llo_original>
